<compile_context>
chip_gen: v7x
topology: tpu7x:2x2x1
jax: 0.10.0
libtpu: 0.0.40
codegen_flags: <defaults>
</compile_context>

<pallas_src>
import functools

import jax
import jax.numpy as jnp
from jax import lax
from jax.experimental import pallas as pl
from jax.experimental.pallas import tpu as pltpu


# ----------------------------- stage 1: M = x @ T -----------------------------

def _xt_matmul_kernel(x_ref, t_ref, m_ref):
    # Grid axis 0 tiles the contraction (input_dim); the output block index is
    # constant across it, so m_ref is resident and acts as the f32 accumulator.
    @pl.when(pl.program_id(0) == 0)
    def _init():
        m_ref[...] = jnp.zeros_like(m_ref)

    m_ref[...] += jnp.dot(x_ref[...], t_ref[...],
                          preferred_element_type=jnp.float32)


# ------------------- stage 2: pairwise L1 + exp + sum over i ------------------

def _pairwise_kernel(m_full_ref, m_j_ref, g_ref, o_ref, *,
                     num_kernels, kernel_dim, chunk_rows, use_bf16):
    nk, kd = num_kernels, kernel_dim
    nkd = nk * kd
    B = m_full_ref.shape[0]
    bj = m_j_ref.shape[0]
    ci = chunk_rows
    num_chunks = B // ci

    m_j = m_j_ref[...]          # (bj, NKD) f32 — delivered by BlockSpec, no slicing
    g = g_ref[...]              # (NKD, NK) group-sum matrix (f32 or bf16)

    def chunk_sum(i0):
        # Load this chunk of M rows straight from VMEM (bounded working set).
        m_i = m_full_ref[pl.ds(i0, ci), :]                       # (ci, NKD)
        # Pairwise |M[i] - M[j]| on the VPU in f32 (no bf16 VALU on v5e).
        diff = jnp.abs(m_i[:, None, :] - m_j[None, :, :])        # (ci, bj, NKD)
        diff2d = diff.reshape(ci * bj, nkd)
        if use_bf16:
            diff2d = diff2d.astype(jnp.bfloat16)
        # L1 reduction over KD per kernel = one MXU matmul against G.
        dist = jnp.dot(diff2d, g, preferred_element_type=jnp.float32)  # (ci*bj, NK)
        e = jnp.exp(-dist).reshape(ci, bj, nk)
        return jnp.sum(e, axis=0)                                # (bj, NK)

    if num_chunks == 1:
        o_ref[...] = chunk_sum(0)                                # single store
    else:
        def body(c, acc):
            i0 = pl.multiple_of(c * ci, ci)
            return acc + chunk_sum(i0)

        acc = lax.fori_loop(0, num_chunks, body,
                            jnp.zeros((bj, nk), jnp.float32),
                            unroll=num_chunks <= 8)
        o_ref[...] = acc                                         # single store


# --------------------------------- wrapper ------------------------------------

def _device_kind():
    try:
        return jax.devices()[0].device_kind.lower()
    except Exception:  # pragma: no cover
        return ""


def _is_v7():
    return "v7" in _device_kind()


def _vmem_limit_bytes(est_bytes):
    # ~48 MiB requestable headroom on v7x (64 MiB physical), ~100 MiB on
    # v5e/v6e (128 MiB physical).  Never go below the 32 MiB default.
    cap = (48 if _is_v7() else 100) * 1024 * 1024
    return int(min(cap, max(32 * 1024 * 1024, est_bytes)))


def _pick_k_tile(d):
    if d <= 2048:
        return d
    for tk in (2048, 1024, 512, 256, 128):
        if d % tk == 0:
            return tk
    return d  # TODO(synk): pad input_dim to a multiple of 128 for odd sizes.


def _pick_i_chunk(batch, bj, nkd):
    budget = 8 * 1024 * 1024  # bytes allowed for the f32 diff intermediate
    cands = [c for c in (batch, 512, 256, 128, 64, 32, 16, 8)
             if c <= batch and batch % c == 0]
    for c in cands:  # descending
        if c * bj * nkd * 4 <= budget:
            return c
    return cands[-1]


def minibatch_discrimination(x, T, num_kernels, kernel_dim, *,
                             block_rows=None, use_bf16=False):
    """Pallas forward of MinibatchDiscrimination. Returns (B, num_kernels) f32."""
    B = x.shape[0]
    if x.ndim == 3:                       # mirrors x.view(batch_size, -1)
        x = x.reshape(B, -1)
    x = x.astype(jnp.float32)
    T = T.astype(jnp.float32)
    D = x.shape[1]
    nk, kd = num_kernels, kernel_dim
    nkd = nk * kd
    assert T.shape == (D, nkd), (T.shape, (D, nkd))

    in_dtype = jnp.bfloat16 if use_bf16 else jnp.float32
    isz = 2 if use_bf16 else 4

    # ---- stage 1: M = x @ T (computed once, K-tiled over input_dim) ----------
    tk = _pick_k_tile(D)
    est1 = (2 * (B * tk + tk * nkd) * isz      # double-buffered x and T tiles
            + 2 * B * nkd * 4                  # output block
            + 4 * 1024 * 1024)                 # slack
    m = pl.pallas_call(
        _xt_matmul_kernel,
        out_shape=jax.ShapeDtypeStruct((B, nkd), jnp.float32),
        grid=(max(D // tk, 1),),
        in_specs=[
            pl.BlockSpec((B, tk), lambda k: (0, k)),
            pl.BlockSpec((tk, nkd), lambda k: (k, 0)),
        ],
        out_specs=pl.BlockSpec((B, nkd), lambda k: (0, 0)),
        compiler_params=pltpu.CompilerParams(
            dimension_semantics=("arbitrary",),
            vmem_limit_bytes=_vmem_limit_bytes(est1)),
    )(x.astype(in_dtype), T.astype(in_dtype))

    # ---- stage 2: pairwise L1 distances, exp, sum over i ---------------------
    if block_rows is None:
        block_rows = B
        # Only split on v7x (2 TensorCores); on v5e/v6e a bigger grid is just a
        # serial loop with per-step overhead.
        if _is_v7() and B % 2 == 0 and (B // 2) % 8 == 0:
            block_rows = B // 2
    assert B % block_rows == 0, (B, block_rows)
    assert block_rows == B or block_rows % 8 == 0, (
        "block_rows must equal B or be a multiple of 8 (output block sublane "
        f"constraint); got {block_rows}")

    ci = _pick_i_chunk(B, block_rows, nkd)

    # G[d, k] = 1 iff feature d belongs to kernel k (block diagonal), built once
    # on the host and DMA'd once (constant block index).
    g = jnp.kron(jnp.eye(nk, dtype=jnp.float32),
                 jnp.ones((kd, 1), dtype=jnp.float32))
    g = g.astype(jnp.bfloat16 if use_bf16 else jnp.float32)      # (NKD, NK)

    g_bytes = nkd * nk * (2 if use_bf16 else 4)
    diff_bytes = ci * block_rows * nkd * (4 + (2 if use_bf16 else 0))
    est2 = (2 * B * nkd * 4                    # M (all rows)
            + 2 * block_rows * nkd * 4         # M_j block
            + 2 * g_bytes                      # G
            + 2 * block_rows * nk * 4          # output block
            + diff_bytes                       # in-kernel diff intermediate
            + 4 * 1024 * 1024)                 # slack

    kernel = functools.partial(
        _pairwise_kernel, num_kernels=nk, kernel_dim=kd,
        chunk_rows=ci, use_bf16=use_bf16)

    return pl.pallas_call(
        kernel,
        out_shape=jax.ShapeDtypeStruct((B, nk), jnp.float32),
        grid=(B // block_rows,),
        in_specs=[
            pl.BlockSpec((B, nkd), lambda j: (0, 0)),            # M: all rows i
            pl.BlockSpec((block_rows, nkd), lambda j: (j, 0)),   # M_j: this block
            pl.BlockSpec((nkd, nk), lambda j: (0, 0)),           # G: constant
        ],
        out_specs=pl.BlockSpec((block_rows, nk), lambda j: (j, 0)),
        compiler_params=pltpu.CompilerParams(
            dimension_semantics=("parallel",),
            vmem_limit_bytes=_vmem_limit_bytes(est2)),
    )(m, m, g)


# -------------------------------- reference -----------------------------------

def _reference(x, T, num_kernels, kernel_dim):
    B = x.shape[0]
    if x.ndim == 3:
        x = x.reshape(B, -1)
    m = jnp.dot(x, T, precision=lax.Precision.HIGHEST)
    m = m.reshape(B, num_kernels, kernel_dim)
    dist = jnp.sum(jnp.abs(m[:, None] - m[None, :]), axis=-1)   # (B, B, NK)
    return jnp.sum(jnp.exp(-dist), axis=0)                      # (B, NK)


if __name__ == "__main__":
    B, C, S = 8, 4, 16                      # x is (B, C, S) -> flattened to (B, 64)
    INPUT_DIM = C * S
    NUM_KERNELS, KERNEL_DIM = 32, 16

    key = jax.random.PRNGKey(0)
    kx, kt = jax.random.split(key)
    x = jax.random.normal(kx, (B, C, S), dtype=jnp.float32)
    # nn.init.normal_(self.T, 0, 1); scaled down so exp(-dist) is not ~0 for
    # every off-diagonal pair and the numerical check is meaningful.
    T = 0.02 * jax.random.normal(kt, (INPUT_DIM, NUM_KERNELS * KERNEL_DIM),
                                 dtype=jnp.float32)

    ref = _reference(x, T, NUM_KERNELS, KERNEL_DIM)

    out = jax.block_until_ready(
        minibatch_discrimination(x, T, NUM_KERNELS, KERNEL_DIM))
    assert out.shape == (B, NUM_KERNELS)
    assert jnp.allclose(out, ref, rtol=1e-3, atol=1e-3), (
        f"f32 path max abs err {jnp.max(jnp.abs(out - ref))}")

    out_bf16 = jax.block_until_ready(
        minibatch_discrimination(x, T, NUM_KERNELS, KERNEL_DIM, use_bf16=True))
    assert jnp.allclose(out_bf16, ref, rtol=5e-2, atol=5e-2), (
        f"bf16 path max abs err {jnp.max(jnp.abs(out_bf16 - ref))}")

    print("KERNEL_OK")
</pallas_src>

<mosaic_0001>
module attributes {stable_mosaic.version = 11 : i64} {
  func.func @_xt_matmul_kernel(%arg0: i32, %arg1: memref<8x64xf32, #tpu.memory_space<vmem>>, %arg2: memref<64x512xf32, #tpu.memory_space<vmem>>, %arg3: memref<8x512xf32, #tpu.memory_space<vmem>>) attributes {dimension_semantics = [#tpu.dimension_semantics<arbitrary>], iteration_bounds = array<i64: 1>, scalar_prefetch = 0 : i64, scratch_operands = 0 : i64, tpu.core_type = #tpu.core_type<tc>, window_params = [{transform_indices = @transform_0, window_bounds = array<i64: 8, 64>}, {transform_indices = @transform_1, window_bounds = array<i64: 64, 512>}, {pipeline_mode = #tpu.pipeline_mode<synchronous>, transform_indices = @transform_2, window_bounds = array<i64: 8, 512>}]} {
    %c0_i32 = arith.constant 0 : i32
    %0 = arith.cmpi eq, %arg0, %c0_i32 : i32
    %1 = arith.extui %0 : i1 to i32
    %c0_i32_0 = arith.constant 0 : i32
    %2 = arith.cmpi ne, %1, %c0_i32_0 : i32
    scf.if %2 {
      %cst_8 = arith.constant 0.000000e+00 : f32
      %9 = vector.broadcast %cst_8 : f32 to vector<8x512xf32>
      %c0_9 = arith.constant 0 : index
      %c0_10 = arith.constant 0 : index
      %10 = vector.load %arg3[%c0_9, %c0_10] : memref<8x512xf32, #tpu.memory_space<vmem>>, vector<8x512xf32>
      tpu.vector_store %arg3[%c0_9, %c0_10], %9 {strides = array<i32>} : memref<8x512xf32, #tpu.memory_space<vmem>>, vector<8x512xf32>,
    } else {
    }
    %c0 = arith.constant 0 : index
    %c0_1 = arith.constant 0 : index
    %3 = vector.load %arg3[%c0, %c0_1] : memref<8x512xf32, #tpu.memory_space<vmem>>, vector<8x512xf32>
    %c0_2 = arith.constant 0 : index
    %c0_3 = arith.constant 0 : index
    %4 = vector.load %arg1[%c0_2, %c0_3] : memref<8x64xf32, #tpu.memory_space<vmem>>, vector<8x64xf32>
    %c0_4 = arith.constant 0 : index
    %c0_5 = arith.constant 0 : index
    %5 = vector.load %arg2[%c0_4, %c0_5] : memref<64x512xf32, #tpu.memory_space<vmem>>, vector<64x512xf32>
    %cst = arith.constant dense<0.000000e+00> : vector<8x512xf32>
    %6 = tpu.matmul %4, %5, %cst {dimension_numbers = #tpu.dot_dimension_numbers<[1], [0], [0], [1], [0, 0, 1, 1], [], []>} : vector<8x64xf32>, vector<64x512xf32>, vector<8x512xf32> -> vector<8x512xf32>
    %7 = arith.addf %3, %6 : vector<8x512xf32>
    %c0_6 = arith.constant 0 : index
    %c0_7 = arith.constant 0 : index
    %8 = vector.load %arg3[%c0_6, %c0_7] : memref<8x512xf32, #tpu.memory_space<vmem>>, vector<8x512xf32>
    tpu.vector_store %arg3[%c0_6, %c0_7], %7 {strides = array<i32>} : memref<8x512xf32, #tpu.memory_space<vmem>>, vector<8x512xf32>,
    return
  }
  func.func @transform_0(%arg0: i32) -> (i32, i32) {
    %c0_i32 = arith.constant 0 : i32
    %c0_i32_0 = arith.constant 0 : i32
    return %c0_i32, %arg0 : i32, i32
  }
  func.func @transform_1(%arg0: i32) -> (i32, i32) {
    %c0_i32 = arith.constant 0 : i32
    %c0_i32_0 = arith.constant 0 : i32
    return %arg0, %c0_i32 : i32, i32
  }
  func.func @transform_2(%arg0: i32) -> (i32, i32) {
    %c0_i32 = arith.constant 0 : i32
    %c0_i32_0 = arith.constant 0 : i32
    %c0_i32_1 = arith.constant 0 : i32
    return %c0_i32, %c0_i32_0 : i32, i32
  }
}

</mosaic_0001>

<llo_original>
// kernel: tpu_custom_call.1
$region0: #{tpu_custom_call.1}
  #allocation0 [shape = 'u32[]', space=smem, size = 0x4, offset = 0x4, fixed_abs, tag = 'smem constant byte address 0x4 - core index']
  #allocation1 [shape = 'u32[144,128]{1,0:T(1,128)}', space=vmem, size = 0x12000, scoped, tag = 'internal scratch']
  %s0 = inlined_call_operand.hbm [shape: f32[8,64], index: 0, kind: input, shape index: {}]
  %s1 = inlined_call_operand.hbm [shape: f32[64,512], index: 1, kind: input, shape index: {}]
  %s2 = inlined_call_operand.hbm [shape: f32[8,512], index: 2, kind: output, shape index: {}]
  %s3 = sld [smem:[#allocation0]]
  $region30: #{tpu_custom_call.1} parent=0
    _
  %s5 = ssub.s32 1, %s3
  %s6 = scalar_select 0, %s5, %s3
  $region1: #{tpu_custom_call.1} parent=0
    #allocation2 [shape = 'u8[4096]{0}', space=vmem, size = 0x1000, scoped, tag = 'input window, operand 0, single buffered']
    #allocation3 [shape = 's32[1]{0}', space=sflag, size = 0x4, scoped, tag = 'scoped memory for tpu_custom_call.1']
    #allocation4 [shape = 's32[1]{0}', space=sflag, size = 0x4, scoped, tag = 'scoped memory for tpu_custom_call.1']
    #allocation5 [shape = 'u8[131072]{0}', space=vmem, size = 0x20000, scoped, tag = 'input window, operand 1, single buffered']
    #allocation6 [shape = 's32[1]{0}', space=sflag, size = 0x4, scoped, tag = 'scoped memory for tpu_custom_call.1']
    #allocation7 [shape = 'u8[16384]{0}', space=vmem, size = 0x4000, scoped, tag = 'output window, operand 0, single buffered']
    %7 = vsyncpa [#allocation3], 0
    %8 = vsyncpa [#allocation6], 0
    %9 = vsyncpa [#allocation4], 0
    // Predicated region
    $region2: #{tpu_custom_call.1} parent=1 // pred_check
      _
    $region3: #{tpu_custom_call.1} parent=1 // pred_check_branch
      %11 = sbr.rel (0) target = $region5
    $region4: #{tpu_custom_call.1} parent=1 // pred_region
      %s13 = ssub.s32 128, 128
      %14 = vsyncadd [#allocation3], %s13
      %s16 = sshll.u32 [#allocation2], 4
      %s17 = int_to_ptr.vmem [resolvable:$true] %s16
      %19 = dma.hbm_to_vmem [thread:$0]  %s0, 128, %s17, [#allocation3]
    $region5: #{tpu_custom_call.1} parent=1 // pred_fallthru
      _
    // Predicated region
    $region6: #{tpu_custom_call.1} parent=1 // pred_check
      _
    $region7: #{tpu_custom_call.1} parent=1 // pred_check_branch
      %21 = sbr.rel (0) target = $region9
    $region8: #{tpu_custom_call.1} parent=1 // pred_region
      %s23 = ssub.s32 4096, 4096
      %24 = vsyncadd [#allocation6], %s23
      %s25 = sshll.u32 [#allocation5], 4
      %s26 = int_to_ptr.vmem [resolvable:$true] %s25
      %31 = dma.hbm_to_vmem [thread:$0]  %s1, 4096, %s26, [#allocation6], 512, 512, 32
    $region9: #{tpu_custom_call.1} parent=1 // pred_fallthru
      _
    // Predicated region
    $region10: #{tpu_custom_call.1} parent=1 // pred_check
      _
    $region11: #{tpu_custom_call.1} parent=1 // pred_check_branch
      %33 = sbr.rel (0) target = $region13
    $region12: #{tpu_custom_call.1} parent=1 // pred_region
      %34 = dma.done [#allocation3], 128
    $region13: #{tpu_custom_call.1} parent=1 // pred_fallthru
      _
    // Predicated region
    $region14: #{tpu_custom_call.1} parent=1 // pred_check
      _
    $region15: #{tpu_custom_call.1} parent=1 // pred_check_branch
      %36 = sbr.rel (0) target = $region17
    $region16: #{tpu_custom_call.1} parent=1 // pred_region
      %37 = dma.done [#allocation6], 4096
    $region17: #{tpu_custom_call.1} parent=1 // pred_fallthru
      _
    %p38 = scmp.eq.s32.totalorder 0, 0
    // Predicated region
    $region18: #{tpu_custom_call.1} parent=1 // pred_check
      %p39 = pneg %p38
    $region19: #{tpu_custom_call.1} parent=1 // pred_check_branch
      %41 = sbr.rel (%p39) target = $region21
    $region20: #{tpu_custom_call.1} parent=1 // pred_region
      %42 = vst [vmem:[#allocation7] sm:$0xff] 0.0
      %43 = vst [vmem:[#allocation7 + $0x8] sm:$0xff] 0.0
      %44 = vst [vmem:[#allocation7 + $0x10] sm:$0xff] 0.0
      %45 = vst [vmem:[#allocation7 + $0x18] sm:$0xff] 0.0
    $region21: #{tpu_custom_call.1} parent=1 // pred_fallthru
      _
    %v46 = vld [vmem:[#allocation7] sm:$0xff]
    %v47 = vld [vmem:[#allocation7 + $0x8] sm:$0xff]
    %v48 = vld [vmem:[#allocation7 + $0x10] sm:$0xff]
    %v49 = vld [vmem:[#allocation7 + $0x18] sm:$0xff]
    %v50 = vld [vmem:[#allocation2] sm:$0xff]
    %v51 = vld [vmem:[#allocation5] sm:$0xff]
    %v52 = vld [vmem:[#allocation5 + $0x8] sm:$0xff]
    %v53 = vld [vmem:[#allocation5 + $0x10] sm:$0xff]
    %v54 = vld [vmem:[#allocation5 + $0x18] sm:$0xff]
    %v55 = vld [vmem:[#allocation5 + $0x20] sm:$0xff]
    %v56 = vld [vmem:[#allocation5 + $0x28] sm:$0xff]
    %v57 = vld [vmem:[#allocation5 + $0x30] sm:$0xff]
    %v58 = vld [vmem:[#allocation5 + $0x38] sm:$0xff]
    %v59 = vld [vmem:[#allocation5 + $0x40] sm:$0xff]
    %v60 = vld [vmem:[#allocation5 + $0x48] sm:$0xff]
    %v61 = vld [vmem:[#allocation5 + $0x50] sm:$0xff]
    %v62 = vld [vmem:[#allocation5 + $0x58] sm:$0xff]
    %v63 = vld [vmem:[#allocation5 + $0x60] sm:$0xff]
    %v64 = vld [vmem:[#allocation5 + $0x68] sm:$0xff]
    %v65 = vld [vmem:[#allocation5 + $0x70] sm:$0xff]
    %v66 = vld [vmem:[#allocation5 + $0x78] sm:$0xff]
    %v67 = vld [vmem:[#allocation5 + $0x80] sm:$0xff]
    %v68 = vld [vmem:[#allocation5 + $0x88] sm:$0xff]
    %v69 = vld [vmem:[#allocation5 + $0x90] sm:$0xff]
    %v70 = vld [vmem:[#allocation5 + $0x98] sm:$0xff]
    %v71 = vld [vmem:[#allocation5 + $0xa0] sm:$0xff]
    %v72 = vld [vmem:[#allocation5 + $0xa8] sm:$0xff]
    %v73 = vld [vmem:[#allocation5 + $0xb0] sm:$0xff]
    %v74 = vld [vmem:[#allocation5 + $0xb8] sm:$0xff]
    %v75 = vld [vmem:[#allocation5 + $0xc0] sm:$0xff]
    %v76 = vld [vmem:[#allocation5 + $0xc8] sm:$0xff]
    %v77 = vld [vmem:[#allocation5 + $0xd0] sm:$0xff]
    %v78 = vld [vmem:[#allocation5 + $0xd8] sm:$0xff]
    %v79 = vld [vmem:[#allocation5 + $0xe0] sm:$0xff]
    %v80 = vld [vmem:[#allocation5 + $0xe8] sm:$0xff]
    %v81 = vld [vmem:[#allocation5 + $0xf0] sm:$0xff]
    %v82 = vld [vmem:[#allocation5 + $0xf8] sm:$0xff]
    %vm83 = vcmask 523264
    %v85 = vsel %vm83, %v50, 0
    %87 = vmatprep.subr.mxu0 %v52
    %88 = vmatpush1.msra.mxu0 %v51
    %89 = vmatprep.subr.mxu0 %v56
    %90 = vmatpush1.msra.mxu0 %v55
    %91 = vmatprep.subr.mxu0 %v60
    %92 = vmatpush1.msra.mxu0 %v59
    %93 = vmatprep.subr.mxu0 %v64
    %94 = vmatpush1.msra.mxu0 %v63
    %95 = vmatprep.subr.mxu0 %v68
    %96 = vmatpush1.msra.mxu0 %v67
    %97 = vmatprep.subr.mxu0 %v72
    %98 = vmatpush1.msra.mxu0 %v71
    %99 = vmatprep.subr.mxu0 %v76
    %100 = vmatpush1.msra.mxu0 %v75
    %101 = vmatprep.subr.mxu0 %v80
    %102 = vmatpush1.msra.mxu0 %v79
    %103 = vmatprep.subr.mxu0 0.0
    %104 = vmatpush1.msra.mxu0 0.0
    %105 = vmatprep.subr.mxu0 0.0
    %106 = vmatpush1.msra.mxu0 0.0
    %107 = vmatprep.subr.mxu0 0.0
    %108 = vmatpush1.msra.mxu0 0.0
    %109 = vmatprep.subr.mxu0 0.0
    %110 = vmatpush1.msra.mxu0 0.0
    %111 = vmatprep.subr.mxu0 0.0
    %112 = vmatpush1.msra.mxu0 0.0
    %113 = vmatprep.subr.mxu0 0.0
    %114 = vmatpush1.msra.mxu0 0.0
    %115 = vmatprep.subr.mxu0 0.0
    %116 = vmatpush1.msra.mxu0 0.0
    %117 = vmatprep.subr.mxu0 0.0
    %118 = vmatpush1.msra.mxu0 0.0
    %119 = vmatprep.subr.mxu0 0.0
    %120 = vmatpush1.msra.mxu0 0.0
    %121 = vmatprep.subr.mxu0 0.0
    %122 = vmatpush1.msra.mxu0 0.0
    %123 = vmatprep.subr.mxu0 0.0
    %124 = vmatpush1.msra.mxu0 0.0
    %125 = vmatprep.subr.mxu0 0.0
    %126 = vmatpush1.msra.mxu0 0.0
    %127 = vmatprep.subr.mxu0 0.0
    %128 = vmatpush1.msra.mxu0 0.0
    %129 = vmatprep.subr.mxu0 0.0
    %130 = vmatpush1.msra.mxu0 0.0
    %131 = vmatprep.subr.mxu0 0.0
    %132 = vmatpush1.msra.mxu0 0.0
    %133 = vmatprep.subr.mxu0 0.0
    %134 = vmatpush1.msra.mxu0 0.0
    %135 = vmatprep.subr.mxu0 0.0
    %136 = vmatpush1.msra.mxu0 0.0
    %137 = vmatprep.subr.mxu0 0.0
    %138 = vmatpush1.msra.mxu0 0.0
    %139 = vmatprep.subr.mxu0 0.0
    %140 = vmatpush1.msra.mxu0 0.0
    %141 = vmatprep.subr.mxu0 0.0
    %142 = vmatpush1.msra.mxu0 0.0
    %143 = vmatprep.subr.mxu0 0.0
    %144 = vmatpush1.msra.mxu0 0.0
    %145 = vmatprep.subr.mxu0 0.0
    %146 = vmatpush1.msra.mxu0 0.0
    %147 = vmatprep.subr.mxu0 0.0
    %148 = vmatpush1.msra.mxu0 0.0
    %149 = vmatprep.subr.mxu0 0.0
    %150 = vmatpush1.msra.mxu0 0.0
    %151 = vmatprep.mubr.f32.mxu0 0.0
    %152 = vmatmul.mubr.f32.gmra.mrb[0].mxu0 %v85
    %v153 = vpop.f32.mrb[0].mxu0
    %v154 = vadd.f32 0.0, %v153
    %v155 = vpop.f32.mrb[0].mxu0
    %v156 = vadd.f32 0.0, %v155
    %157 = vdwg.mxu0
    %158 = vmatprep.subr.mxu0 %v54
    %159 = vmatpush1.msra.mxu0 %v53
    %160 = vmatprep.subr.mxu0 %v58
    %161 = vmatpush1.msra.mxu0 %v57
    %162 = vmatprep.subr.mxu0 %v62
    %163 = vmatpush1.msra.mxu0 %v61
    %164 = vmatprep.subr.mxu0 %v66
    %165 = vmatpush1.msra.mxu0 %v65
    %166 = vmatprep.subr.mxu0 %v70
    %167 = vmatpush1.msra.mxu0 %v69
    %168 = vmatprep.subr.mxu0 %v74
    %169 = vmatpush1.msra.mxu0 %v73
    %170 = vmatprep.subr.mxu0 %v78
    %171 = vmatpush1.msra.mxu0 %v77
    %172 = vmatprep.subr.mxu0 %v82
    %173 = vmatpush1.msra.mxu0 %v81
    %174 = vmatprep.subr.mxu0 0.0
    %175 = vmatpush1.msra.mxu0 0.0
    %176 = vmatprep.subr.mxu0 0.0
    %177 = vmatpush1.msra.mxu0 0.0
    %178 = vmatprep.subr.mxu0 0.0
    %179 = vmatpush1.msra.mxu0 0.0
    %180 = vmatprep.subr.mxu0 0.0
    %181 = vmatpush1.msra.mxu0 0.0
    %182 = vmatprep.subr.mxu0 0.0
    %183 = vmatpush1.msra.mxu0 0.0
    %184 = vmatprep.subr.mxu0 0.0
    %185 = vmatpush1.msra.mxu0 0.0
    %186 = vmatprep.subr.mxu0 0.0
    %187 = vmatpush1.msra.mxu0 0.0
    %188 = vmatprep.subr.mxu0 0.0
    %189 = vmatpush1.msra.mxu0 0.0
    %190 = vmatprep.subr.mxu0 0.0
    %191 = vmatpush1.msra.mxu0 0.0
    %192 = vmatprep.subr.mxu0 0.0
    %193 = vmatpush1.msra.mxu0 0.0
    %194 = vmatprep.subr.mxu0 0.0
    %195 = vmatpush1.msra.mxu0 0.0
    %196 = vmatprep.subr.mxu0 0.0
    %197 = vmatpush1.msra.mxu0 0.0
    %198 = vmatprep.subr.mxu0 0.0
    %199 = vmatpush1.msra.mxu0 0.0
    %200 = vmatprep.subr.mxu0 0.0
    %201 = vmatpush1.msra.mxu0 0.0
    %202 = vmatprep.subr.mxu0 0.0
    %203 = vmatpush1.msra.mxu0 0.0
    %204 = vmatprep.subr.mxu0 0.0
    %205 = vmatpush1.msra.mxu0 0.0
    %206 = vmatprep.subr.mxu0 0.0
    %207 = vmatpush1.msra.mxu0 0.0
    %208 = vmatprep.subr.mxu0 0.0
    %209 = vmatpush1.msra.mxu0 0.0
    %210 = vmatprep.subr.mxu0 0.0
    %211 = vmatpush1.msra.mxu0 0.0
    %212 = vmatprep.subr.mxu0 0.0
    %213 = vmatpush1.msra.mxu0 0.0
    %214 = vmatprep.subr.mxu0 0.0
    %215 = vmatpush1.msra.mxu0 0.0
    %216 = vmatprep.subr.mxu0 0.0
    %217 = vmatpush1.msra.mxu0 0.0
    %218 = vmatprep.subr.mxu0 0.0
    %219 = vmatpush1.msra.mxu0 0.0
    %220 = vmatprep.subr.mxu0 0.0
    %221 = vmatpush1.msra.mxu0 0.0
    %222 = vmatprep.mubr.f32.mxu0 0.0
    %223 = vmatmul.mubr.f32.gmra.mrb[0].mxu0 %v85
    %v224 = vpop.f32.mrb[0].mxu0
    %v225 = vadd.f32 0.0, %v224
    %v226 = vpop.f32.mrb[0].mxu0
    %v227 = vadd.f32 0.0, %v226
    %228 = vdwg.mxu0
    %v229 = vadd.f32 %v46, %v154
    %v230 = vadd.f32 %v47, %v156
    %v231 = vadd.f32 %v48, %v225
    %v232 = vadd.f32 %v49, %v227
    %233 = vst [vmem:[#allocation7] sm:$0xff] %v229
    %234 = vst [vmem:[#allocation7 + $0x8] sm:$0xff] %v230
    %235 = vst [vmem:[#allocation7 + $0x10] sm:$0xff] %v231
    %236 = vst [vmem:[#allocation7 + $0x18] sm:$0xff] %v232
    // Predicated region
    $region22: #{tpu_custom_call.1} parent=1 // pred_check
      _
    $region23: #{tpu_custom_call.1} parent=1 // pred_check_branch
      %238 = sbr.rel (0) target = $region25
    $region24: #{tpu_custom_call.1} parent=1 // pred_region
      %s240 = ssub.s32 512, 512
      %241 = vsyncadd [#allocation4], %s240
      %s243 = sshll.u32 [#allocation7], 4
      %s244 = int_to_ptr.vmem [resolvable:$true] %s243
      %246 = dma.vmem_to_hbm [thread:$0]  %s244, 512, %s2, [#allocation4]
    $region25: #{tpu_custom_call.1} parent=1 // pred_fallthru
      _
    // Predicated region
    $region26: #{tpu_custom_call.1} parent=1 // pred_check
      _
    $region27: #{tpu_custom_call.1} parent=1 // pred_check_branch
      %248 = sbr.rel (0) target = $region29
    $region28: #{tpu_custom_call.1} parent=1 // pred_region
      %249 = dma.done [#allocation4], 512
    $region29: #{tpu_custom_call.1} parent=1 // pred_fallthru
      _
    %250 = vsyncpa [#allocation3], 1
    %251 = vsyncpa [#allocation6], 1
    %252 = vsyncpa [#allocation4], 1

</llo_original>
